<compile_context>
chip_gen: v5e
topology: v5e:2x2
jax: 0.10.0
libtpu: 0.0.40
codegen_flags: <defaults>
</compile_context>

<pallas_src>
import functools

import jax
import jax.numpy as jnp
from jax import lax
from jax.experimental import pallas as pl
from jax.experimental.pallas import tpu as pltpu

LANES = 128            # vreg lane width
SUBLANES = 8           # f32 sublane count
MAX_TILE_ROWS = 8192   # 8192 * 128 * 4 B = 4 MiB per input block
MIN_SPLIT_ROWS = 2048  # ~1 MiB/input: smallest tile that amortizes step overhead
CHUNK_ROWS = 512       # in-kernel accumulation chunk (256 KiB per input)
_F32_BYTES = 4


def _round_up(a, b):
    return (a + b - 1) // b * b


def _pow_const(base, gamma):
    """base ** gamma without log/exp when gamma is a small non-negative integer."""
    g = float(gamma)
    if g.is_integer() and 0.0 <= g <= 8.0:
        gi = int(g)
        if gi == 0:
            return jnp.ones_like(base)
        out = base
        for _ in range(gi - 1):
            out = out * base
        return out
    return base ** g


def _focal_elementwise(x, t, *, alpha, gamma, logits, binary_targets):
    """Elementwise focal loss; pure jnp so it works in-kernel and in epilogues."""
    if logits:
        # F.binary_cross_entropy_with_logits, reduce=False
        bce = jnp.maximum(x, 0.0) - x * t + jnp.log1p(jnp.exp(-jnp.abs(x)))
        pt = jnp.exp(-bce)
    elif binary_targets:
        # Opt-in fast path, exact for t in {0,1} (incl. PyTorch's -100 log clamp):
        # one log instead of two logs + one exp.
        pt = t * x + (1.0 - t) * (1.0 - x)
        bce = -jnp.maximum(jnp.log(pt), -100.0)
    else:
        # F.binary_cross_entropy, reduce=False (PyTorch clamps log at -100)
        log_p = jnp.maximum(jnp.log(x), -100.0)
        log_1mp = jnp.maximum(jnp.log(1.0 - x), -100.0)
        bce = -(t * log_p + (1.0 - t) * log_1mp)
        pt = jnp.exp(-bce)
    fl = _pow_const(1.0 - pt, gamma) * bce
    if float(alpha) != 1.0:
        fl = alpha * fl
    return fl


# --------------------------------------------------------------------------- #
# Kernels
# --------------------------------------------------------------------------- #
def _partial_sum_kernel(x_ref, t_ref, out_ref, *, alpha, gamma, logits,
                        binary_targets, tile_rows, chunk_rows,
                        valid_rows_last, last_tile_ragged):
    """Per-tile focal loss, reduced chunk-wise to one (8, 128) partial-sum block."""
    num_full = tile_rows // chunk_rows
    rem_rows = tile_rows - num_full * chunk_rows   # multiple of 8

    def chunk_sum(start, nrows, row_limit):
        xs = x_ref[pl.ds(start, nrows), :]
        ts = t_ref[pl.ds(start, nrows), :]
        fl = _focal_elementwise(xs, ts, alpha=alpha, gamma=gamma, logits=logits,
                                binary_targets=binary_targets)
        if row_limit is not None:
            # Tile-local row mask (boundary tile only); applied BEFORE the sum
            # so undefined data in over-covered rows never propagates.
            r = lax.broadcasted_iota(jnp.int32, (nrows, LANES), 0) + start
            fl = jnp.where(r < row_limit, fl, 0.0)
        return fl.reshape(nrows // SUBLANES, SUBLANES, LANES).sum(axis=0)

    def tile_sum(row_limit):
        if num_full == 1 and rem_rows == 0:
            return chunk_sum(0, tile_rows, row_limit)
        acc = jnp.zeros((SUBLANES, LANES), jnp.float32)

        def body(c, a):
            start = pl.multiple_of(c * chunk_rows, chunk_rows)
            return a + chunk_sum(start, chunk_rows, row_limit)

        acc = lax.fori_loop(0, num_full, body, acc, unroll=num_full <= 2)
        if rem_rows:
            acc = acc + chunk_sum(num_full * chunk_rows, rem_rows, row_limit)
        return acc

    if not last_tile_ragged:
        # Aligned case: no mask work anywhere (trace-time skip).
        out_ref[...] = tile_sum(None)
    else:
        last = pl.num_programs(0) - 1

        @pl.when(pl.program_id(0) != last)
        def _():
            out_ref[...] = tile_sum(None)          # interior tiles: no mask work

        @pl.when(pl.program_id(0) == last)
        def _():
            out_ref[...] = tile_sum(valid_rows_last)


def _elementwise_kernel(x_ref, t_ref, out_ref, *, alpha, gamma, logits,
                        binary_targets, tile_rows, chunk_rows):
    """Per-tile elementwise focal loss, streamed chunk-wise through the output."""
    num_full = tile_rows // chunk_rows
    rem_rows = tile_rows - num_full * chunk_rows

    def do_chunk(start, nrows):
        xs = x_ref[pl.ds(start, nrows), :]
        ts = t_ref[pl.ds(start, nrows), :]
        out_ref[pl.ds(start, nrows), :] = _focal_elementwise(
            xs, ts, alpha=alpha, gamma=gamma, logits=logits,
            binary_targets=binary_targets)

    if num_full == 1 and rem_rows == 0:
        out_ref[...] = _focal_elementwise(
            x_ref[...], t_ref[...], alpha=alpha, gamma=gamma, logits=logits,
            binary_targets=binary_targets)
        return

    def body(c, carry):
        do_chunk(pl.multiple_of(c * chunk_rows, chunk_rows), chunk_rows)
        return carry

    lax.fori_loop(0, num_full, body, jnp.int32(0), unroll=num_full <= 2)
    if rem_rows:
        do_chunk(num_full * chunk_rows, rem_rows)


# --------------------------------------------------------------------------- #
# Tiling / VMEM policy
# --------------------------------------------------------------------------- #
def _vmem_budget_bytes():
    """~3/4 of physical VMEM; the rest is left for Mosaic internal scratch."""
    try:
        cap = int(pltpu.get_tpu_info().vmem_capacity_bytes)
    except Exception:
        cap = 64 << 20   # conservative fallback: v7x per-TC VMEM
    return (cap * 3) // 4


def _bytes_per_tile_row(streams_output):
    per = 2 * 2 * LANES * _F32_BYTES          # 2 f32 inputs, double-buffered
    if streams_output:
        per += 2 * LANES * _F32_BYTES         # f32 output block, double-buffered
    return per


def _choose_tile_rows(rows, streams_output, max_tile_rows):
    """rows is a multiple of 8 (>= 8).  Returns a multiple of 8, <= rows."""
    if max_tile_rows is not None:
        cap = max(SUBLANES,
                  (min(int(max_tile_rows), rows) // SUBLANES) * SUBLANES)
    else:
        budget = _vmem_budget_bytes() - (8 << 20)   # headroom for scratch
        cap = budget // _bytes_per_tile_row(streams_output)
        cap = max(SUBLANES, min(MAX_TILE_ROWS, (cap // SUBLANES) * SUBLANES))
    if rows <= cap:
        if rows >= 2 * MIN_SPLIT_ROWS:
            # Split in two so v7x's second TensorCore gets work; each half still
            # amortizes the ~0.35 us per-step overhead.
            return _round_up(pl.cdiv(rows, 2), SUBLANES)
        return rows
    tile_rows = cap
    num_tiles = pl.cdiv(rows, tile_rows)
    if num_tiles % 2:
        # Prefer an even tile count (v7x megacore balance) while keeping tiles
        # large enough to stay near the HBM roofline.
        alt = _round_up(pl.cdiv(rows, num_tiles + 1), SUBLANES)
        if alt >= MIN_SPLIT_ROWS:
            tile_rows = alt
    return tile_rows


def _vmem_limit_bytes(tile_rows, streams_output):
    need = tile_rows * _bytes_per_tile_row(streams_output)
    if not streams_output:
        need += 2 * SUBLANES * LANES * _F32_BYTES   # (8,128) partial-sum blocks
    limit = max(need + (8 << 20), 32 << 20)
    return int(min(limit, _vmem_budget_bytes()))


# --------------------------------------------------------------------------- #
# Public wrapper
# --------------------------------------------------------------------------- #
def focal_loss(inputs, targets, alpha=1.0, gamma=2.0, logits=False, reduce=True,
               binary_targets=False, max_tile_rows=None):
    """JAX/Pallas equivalent of FocalLoss.forward.

    binary_targets=True is an opt-in fast path (exact for {0,1} targets with
    logits=False) that trades 3 transcendentals for 1; default semantics are
    unchanged.  max_tile_rows is a test/tuning hook (None = VMEM-budgeted).
    """
    orig_shape = inputs.shape
    x = inputs.astype(jnp.float32).reshape(-1)
    t = targets.astype(jnp.float32).reshape(-1)
    n = x.size
    elem_kwargs = dict(alpha=float(alpha), gamma=float(gamma),
                       logits=bool(logits), binary_targets=bool(binary_targets))
    if n == 0:
        return (jnp.float32(jnp.nan) if reduce
                else jnp.zeros(orig_shape, jnp.float32))

    # Kernel consumes the largest (8*128)-aligned prefix as a lane-dense
    # (rows, 128) slab -- no HBM padding pass.  The < 1024-element tail (if
    # any) is folded into the tiny jnp epilogue.
    n_kernel = (n // (SUBLANES * LANES)) * (SUBLANES * LANES)
    if n_kernel == 0:
        # Degenerate tiny input: plain jnp (kernel launch not worth it).
        fl = _focal_elementwise(x, t, **elem_kwargs)
        return jnp.sum(fl) / jnp.float32(n) if reduce else fl.reshape(orig_shape)

    rows = n_kernel // LANES                    # multiple of 8, >= 8
    x2 = x[:n_kernel].reshape(rows, LANES)      # no-op when n is aligned
    t2 = t[:n_kernel].reshape(rows, LANES)

    streams_output = not reduce
    tile_rows = _choose_tile_rows(rows, streams_output, max_tile_rows)
    chunk_rows = min(CHUNK_ROWS, tile_rows)
    num_tiles = pl.cdiv(rows, tile_rows)
    valid_rows_last = rows - (num_tiles - 1) * tile_rows
    last_tile_ragged = valid_rows_last != tile_rows

    in_specs = [pl.BlockSpec((tile_rows, LANES), lambda i: (i, 0)),
                pl.BlockSpec((tile_rows, LANES), lambda i: (i, 0))]
    compiler_params = pltpu.CompilerParams(
        dimension_semantics=("parallel",),
        vmem_limit_bytes=_vmem_limit_bytes(tile_rows, streams_output))

    if reduce:
        kernel = functools.partial(
            _partial_sum_kernel, tile_rows=tile_rows, chunk_rows=chunk_rows,
            valid_rows_last=valid_rows_last, last_tile_ragged=last_tile_ragged,
            **elem_kwargs)
        partials = pl.pallas_call(
            kernel,
            out_shape=jax.ShapeDtypeStruct((num_tiles * SUBLANES, LANES),
                                           jnp.float32),
            grid=(num_tiles,),
            in_specs=in_specs,
            out_specs=pl.BlockSpec((SUBLANES, LANES), lambda i: (i, 0)),
            compiler_params=compiler_params,
        )(x2, t2)
        total = jnp.sum(partials)
        if n_kernel != n:   # <= 1023-element ragged tail, tiny jnp epilogue
            total = total + jnp.sum(
                _focal_elementwise(x[n_kernel:], t[n_kernel:], **elem_kwargs))
        return total / jnp.float32(n)

    # reduce=False: elementwise focal loss, same shape as inputs.
    kernel = functools.partial(_elementwise_kernel, tile_rows=tile_rows,
                               chunk_rows=chunk_rows, **elem_kwargs)
    out = pl.pallas_call(
        kernel,
        out_shape=jax.ShapeDtypeStruct((rows, LANES), jnp.float32),
        grid=(num_tiles,),
        in_specs=in_specs,
        out_specs=pl.BlockSpec((tile_rows, LANES), lambda i: (i, 0)),
        compiler_params=compiler_params,
    )(x2, t2)
    out_flat = out.reshape(-1)
    if n_kernel != n:
        tail = _focal_elementwise(x[n_kernel:], t[n_kernel:], **elem_kwargs)
        out_flat = jnp.concatenate([out_flat, tail])
    return out_flat.reshape(orig_shape)


def _focal_loss_ref(inputs, targets, alpha=1.0, gamma=2.0, logits=False,
                    reduce=True):
    """Pure-JAX reference mirroring the PyTorch module exactly."""
    x = inputs.astype(jnp.float32)
    t = targets.astype(jnp.float32)
    if logits:
        bce = jnp.maximum(x, 0.0) - x * t + jnp.log1p(jnp.exp(-jnp.abs(x)))
    else:
        bce = -(t * jnp.maximum(jnp.log(x), -100.0)
                + (1.0 - t) * jnp.maximum(jnp.log(1.0 - x), -100.0))
    pt = jnp.exp(-bce)
    fl = alpha * (1.0 - pt) ** gamma * bce
    return jnp.mean(fl) if reduce else fl


if __name__ == "__main__":
    key = jax.random.PRNGKey(0)
    ks = jax.random.split(key, 6)

    # NCHW-shaped probabilities in (0, 1) and binary targets (logits=False default).
    shape = (2, 4, 16, 16)
    inputs = jax.random.uniform(ks[0], shape, jnp.float32, minval=0.02, maxval=0.98)
    targets = (jax.random.uniform(ks[1], shape, jnp.float32) > 0.5).astype(jnp.float32)

    # 1. Default module config: alpha=1, gamma=2, logits=False, reduce=True.
    loss = jax.block_until_ready(focal_loss(inputs, targets))
    ref = _focal_loss_ref(inputs, targets)
    assert jnp.allclose(loss, ref, rtol=1e-5, atol=1e-6), (loss, ref)

    # 2. reduce=False elementwise path.
    fl_map = jax.block_until_ready(focal_loss(inputs, targets, reduce=False))
    ref_map = _focal_loss_ref(inputs, targets, reduce=False)
    assert fl_map.shape == shape
    assert jnp.allclose(fl_map, ref_map, rtol=1e-5, atol=1e-6)

    # 3. Opt-in single-log fast path (exact for 0/1 targets, logits=False).
    loss_fast = jax.block_until_ready(
        focal_loss(inputs, targets, binary_targets=True))
    assert jnp.allclose(loss_fast, ref, rtol=1e-5, atol=1e-6), (loss_fast, ref)

    # 4. logits=True on a lane-ragged shape: kernel runs on the 1024-aligned
    #    prefix, the 302-element tail is folded into the jnp epilogue (no pad).
    rshape = (2, 3, 13, 17)  # 1326 elements
    logit_in = jax.random.normal(ks[2], rshape, jnp.float32)
    rtargets = (jax.random.uniform(ks[3], rshape, jnp.float32) > 0.5).astype(jnp.float32)
    loss_lg = jax.block_until_ready(focal_loss(logit_in, rtargets, logits=True))
    ref_lg = _focal_loss_ref(logit_in, rtargets, logits=True)
    assert jnp.allclose(loss_lg, ref_lg, rtol=1e-5, atol=1e-6), (loss_lg, ref_lg)
    map_lg = jax.block_until_ready(
        focal_loss(logit_in, rtargets, logits=True, reduce=False))
    assert jnp.allclose(map_lg,
                        _focal_loss_ref(logit_in, rtargets, logits=True,
                                        reduce=False),
                        rtol=1e-5, atol=1e-6)

    # 5. Multi-tile grid with a ragged last tile (exercises the pl.when-gated
    #    boundary-row mask and Pallas partial-block writeback) via a forced tile.
    mshape = (3, 4, 16, 16)  # 3072 elems = 24 rows; tile_rows=16 -> tiles of 16 + 8
    minp = jax.random.uniform(ks[4], mshape, jnp.float32, minval=0.02, maxval=0.98)
    mtgt = (jax.random.uniform(ks[5], mshape, jnp.float32) > 0.5).astype(jnp.float32)
    loss_m = jax.block_until_ready(focal_loss(minp, mtgt, max_tile_rows=16))
    assert jnp.allclose(loss_m, _focal_loss_ref(minp, mtgt), rtol=1e-5, atol=1e-6)
    map_m = jax.block_until_ready(
        focal_loss(minp, mtgt, reduce=False, max_tile_rows=16))
    assert jnp.allclose(map_m, _focal_loss_ref(minp, mtgt, reduce=False),
                        rtol=1e-5, atol=1e-6)

    # 6. Chunked in-kernel accumulation (one full 512-row chunk + 64-row rem).
    cshape = (1, 8, 96, 96)  # 73728 elements = 576 rows
    cinp = jax.random.uniform(ks[0], cshape, jnp.float32, minval=0.02, maxval=0.98)
    ctgt = (jax.random.uniform(ks[1], cshape, jnp.float32) > 0.5).astype(jnp.float32)
    loss_c = jax.block_until_ready(focal_loss(cinp, ctgt))
    assert jnp.allclose(loss_c, _focal_loss_ref(cinp, ctgt), rtol=1e-5, atol=1e-6)

    print("KERNEL_OK")
</pallas_src>

<mosaic_0001>
module attributes {stable_mosaic.version = 11 : i64} {
  func.func @_partial_sum_kernel(%arg0: i32, %arg1: memref<16x128xf32, #tpu.memory_space<vmem>>, %arg2: memref<16x128xf32, #tpu.memory_space<vmem>>, %arg3: memref<8x128xf32, #tpu.memory_space<vmem>>) attributes {dimension_semantics = [#tpu.dimension_semantics<parallel>], iteration_bounds = array<i64: 1>, scalar_prefetch = 0 : i64, scratch_operands = 0 : i64, tpu.core_type = #tpu.core_type<tc>, window_params = [{transform_indices = @transform_0, window_bounds = array<i64: 16, 128>}, {transform_indices = @transform_1, window_bounds = array<i64: 16, 128>}, {transform_indices = @transform_2, window_bounds = array<i64: 8, 128>}]} {
    %c0 = arith.constant 0 : index
    %c0_0 = arith.constant 0 : index
    %0 = vector.load %arg1[%c0, %c0_0] : memref<16x128xf32, #tpu.memory_space<vmem>>, vector<16x128xf32>
    %c0_1 = arith.constant 0 : index
    %c0_2 = arith.constant 0 : index
    %1 = vector.load %arg2[%c0_1, %c0_2] : memref<16x128xf32, #tpu.memory_space<vmem>>, vector<16x128xf32>
    %2 = math.log %0 : vector<16x128xf32>
    %cst = arith.constant -1.000000e+02 : f32
    %3 = vector.broadcast %cst : f32 to vector<16x128xf32>
    %4 = arith.maximumf %2, %3 : vector<16x128xf32>
    %cst_3 = arith.constant 1.000000e+00 : f32
    %5 = vector.broadcast %cst_3 : f32 to vector<16x128xf32>
    %6 = arith.subf %5, %0 : vector<16x128xf32>
    %7 = math.log %6 : vector<16x128xf32>
    %cst_4 = arith.constant -1.000000e+02 : f32
    %8 = vector.broadcast %cst_4 : f32 to vector<16x128xf32>
    %9 = arith.maximumf %7, %8 : vector<16x128xf32>
    %10 = arith.mulf %1, %4 : vector<16x128xf32>
    %cst_5 = arith.constant 1.000000e+00 : f32
    %11 = vector.broadcast %cst_5 : f32 to vector<16x128xf32>
    %12 = arith.subf %11, %1 : vector<16x128xf32>
    %13 = arith.mulf %12, %9 : vector<16x128xf32>
    %14 = arith.addf %10, %13 : vector<16x128xf32>
    %cst_6 = arith.constant 0.000000e+00 : f32
    %15 = vector.broadcast %cst_6 : f32 to vector<16x128xf32>
    %16 = arith.subf %15, %14 : vector<16x128xf32>
    %cst_7 = arith.constant 0.000000e+00 : f32
    %17 = vector.broadcast %cst_7 : f32 to vector<16x128xf32>
    %18 = arith.subf %17, %16 : vector<16x128xf32>
    %19 = math.exp %18 : vector<16x128xf32>
    %cst_8 = arith.constant 1.000000e+00 : f32
    %20 = vector.broadcast %cst_8 : f32 to vector<16x128xf32>
    %21 = arith.subf %20, %19 : vector<16x128xf32>
    %22 = arith.mulf %21, %21 : vector<16x128xf32>
    %23 = arith.mulf %22, %16 : vector<16x128xf32>
    %24 = vector.shape_cast %23 : vector<16x128xf32> to vector<2x8x128xf32>
    %cst_9 = arith.constant dense<0.000000e+00> : vector<8x128xf32>
    %25 = vector.multi_reduction <add>, %24, %cst_9 [0] : vector<2x8x128xf32> to vector<8x128xf32>
    %c0_10 = arith.constant 0 : index
    %c0_11 = arith.constant 0 : index
    %26 = vector.load %arg3[%c0_10, %c0_11] : memref<8x128xf32, #tpu.memory_space<vmem>>, vector<8x128xf32>
    tpu.vector_store %arg3[%c0_10, %c0_11], %25 {strides = array<i32>} : memref<8x128xf32, #tpu.memory_space<vmem>>, vector<8x128xf32>,
    return
  }
  func.func @transform_0(%arg0: i32) -> (i32, i32) {
    %c0_i32 = arith.constant 0 : i32
    %c0_i32_0 = arith.constant 0 : i32
    return %arg0, %c0_i32 : i32, i32
  }
  func.func @transform_1(%arg0: i32) -> (i32, i32) {
    %c0_i32 = arith.constant 0 : i32
    %c0_i32_0 = arith.constant 0 : i32
    return %arg0, %c0_i32 : i32, i32
  }
  func.func @transform_2(%arg0: i32) -> (i32, i32) {
    %c0_i32 = arith.constant 0 : i32
    %c0_i32_0 = arith.constant 0 : i32
    return %arg0, %c0_i32 : i32, i32
  }
}

</mosaic_0001>

<llo_original>
// kernel: tpu_custom_call.1
$region0: #{tpu_custom_call.1}
  #allocation0 [shape = 'u32[]', space=smem, size = 0x4, offset = 0x4, fixed_abs, tag = 'smem constant byte address 0x4 - core index']
  #allocation1 [shape = 'u32[72,128]{1,0:T(1,128)}', space=vmem, size = 0x9000, scoped, tag = 'internal scratch']
  %s0 = inlined_call_operand.hbm [shape: f32[16,128], index: 0, kind: input, shape index: {}]
  %s1 = inlined_call_operand.hbm [shape: f32[16,128], index: 1, kind: input, shape index: {}]
  %s2 = inlined_call_operand.hbm [shape: f32[8,128], index: 2, kind: output, shape index: {}]
  %s3 = sld [smem:[#allocation0]]
  $region26: #{tpu_custom_call.1} parent=0
    _
  %s5 = ssub.s32 1, %s3
  %s6 = scalar_select 0, %s5, %s3
  $region1: #{tpu_custom_call.1} parent=0
    #allocation2 [shape = 'u8[8192]{0}', space=vmem, size = 0x2000, scoped, tag = 'input window, operand 0, single buffered']
    #allocation3 [shape = 's32[1]{0}', space=sflag, size = 0x4, scoped, tag = 'scoped memory for tpu_custom_call.1']
    #allocation4 [shape = 's32[1]{0}', space=sflag, size = 0x4, scoped, tag = 'scoped memory for tpu_custom_call.1']
    #allocation5 [shape = 'u8[8192]{0}', space=vmem, size = 0x2000, scoped, tag = 'input window, operand 1, single buffered']
    #allocation6 [shape = 's32[1]{0}', space=sflag, size = 0x4, scoped, tag = 'scoped memory for tpu_custom_call.1']
    #allocation7 [shape = 'u8[4096]{0}', space=vmem, size = 0x1000, scoped, tag = 'output window, operand 0, single buffered']
    %7 = vsyncpa [#allocation3], 0
    %8 = vsyncpa [#allocation6], 0
    %9 = vsyncpa [#allocation4], 0
    // Predicated region
    $region2: #{tpu_custom_call.1} parent=1 // pred_check
      _
    $region3: #{tpu_custom_call.1} parent=1 // pred_check_branch
      %11 = sbr.rel (0) target = $region5
    $region4: #{tpu_custom_call.1} parent=1 // pred_region
      %13 = vsyncadd [#allocation3], 0
      %s14 = sshll.u32 %s0, 4
      %s15 = int_to_ptr.hbm [resolvable:$true] %s14
      %s16 = sshll.u32 [#allocation2], 4
      %s17 = int_to_ptr.vmem [resolvable:$true] %s16
      %22 = dma.hbm_to_vmem [thread:$0]  %s15, 256, %s17, [#allocation3], 128, 128, 8
    $region5: #{tpu_custom_call.1} parent=1 // pred_fallthru
      _
    // Predicated region
    $region6: #{tpu_custom_call.1} parent=1 // pred_check
      _
    $region7: #{tpu_custom_call.1} parent=1 // pred_check_branch
      %24 = sbr.rel (0) target = $region9
    $region8: #{tpu_custom_call.1} parent=1 // pred_region
      %26 = vsyncadd [#allocation6], 0
      %s27 = sshll.u32 %s1, 4
      %s28 = int_to_ptr.hbm [resolvable:$true] %s27
      %s29 = sshll.u32 [#allocation5], 4
      %s30 = int_to_ptr.vmem [resolvable:$true] %s29
      %35 = dma.hbm_to_vmem [thread:$0]  %s28, 256, %s30, [#allocation6], 128, 128, 8
    $region9: #{tpu_custom_call.1} parent=1 // pred_fallthru
      _
    // Predicated region
    $region10: #{tpu_custom_call.1} parent=1 // pred_check
      _
    $region11: #{tpu_custom_call.1} parent=1 // pred_check_branch
      %37 = sbr.rel (0) target = $region13
    $region12: #{tpu_custom_call.1} parent=1 // pred_region
      %39 = dma.done [#allocation3], 256
    $region13: #{tpu_custom_call.1} parent=1 // pred_fallthru
      _
    // Predicated region
    $region14: #{tpu_custom_call.1} parent=1 // pred_check
      _
    $region15: #{tpu_custom_call.1} parent=1 // pred_check_branch
      %41 = sbr.rel (0) target = $region17
    $region16: #{tpu_custom_call.1} parent=1 // pred_region
      %43 = dma.done [#allocation6], 256
    $region17: #{tpu_custom_call.1} parent=1 // pred_fallthru
      _
    %v44 = vld [vmem:[#allocation2] sm:$0xff]
    %v45 = vld [vmem:[#allocation2 + $0x8] sm:$0xff]
    %v46 = vld [vmem:[#allocation5] sm:$0xff]
    %v47 = vld [vmem:[#allocation5 + $0x8] sm:$0xff]
    %v48 = vlog2.pop %v44
    %v49 = vmul.f32 %v48, 0.6931472
    %v50 = vlog2.pop %v45
    %v51 = vmul.f32 %v50, 0.6931472
    %v52 = vmax.f32 %v49, -100.0
    %v53 = vmax.f32 %v51, -100.0
    %v54 = vsub.f32 1.0, %v44
    %v55 = vsub.f32 1.0, %v45
    %v56 = vlog2.pop %v54
    %v57 = vmul.f32 %v56, 0.6931472
    %v58 = vlog2.pop %v55
    %v59 = vmul.f32 %v58, 0.6931472
    %v60 = vmax.f32 %v57, -100.0
    %v61 = vmax.f32 %v59, -100.0
    %v62 = vmul.f32 %v46, %v52
    %v63 = vmul.f32 %v47, %v53
    %v64 = vsub.f32 1.0, %v46
    %v65 = vsub.f32 1.0, %v47
    %v66 = vmul.f32 %v64, %v60
    %v67 = vmul.f32 %v65, %v61
    %v68 = vadd.f32 %v62, %v66
    %v69 = vadd.f32 %v63, %v67
    %v70 = vsub.f32 0.0, %v68
    %v71 = vsub.f32 0.0, %v69
    %v72 = vsub.f32 0.0, %v70
    %v73 = vsub.f32 0.0, %v71
    %v74 = vmul.f32 %v72, 1.442695
    %v75 = vpow.pop %v74
    %v76 = vmul.f32 %v73, 1.442695
    %v77 = vpow.pop %v76
    %v78 = vsub.f32 1.0, %v75
    %v79 = vsub.f32 1.0, %v77
    %v80 = vmul.f32 %v78, %v78
    %v81 = vmul.f32 %v79, %v79
    %v82 = vmul.f32 %v80, %v70
    %v83 = vmul.f32 %v81, %v71
    %v84 = vadd.f32 %v82, %v83
    %85 = vst [vmem:[#allocation7] sm:$0xff] %v84
    // Predicated region
    $region18: #{tpu_custom_call.1} parent=1 // pred_check
      _
    $region19: #{tpu_custom_call.1} parent=1 // pred_check_branch
      %87 = sbr.rel (0) target = $region21
    $region20: #{tpu_custom_call.1} parent=1 // pred_region
      %89 = vsyncadd [#allocation4], 0
      %s91 = sshll.u32 [#allocation7], 4
      %s92 = int_to_ptr.vmem [resolvable:$true] %s91
      %s93 = sshll.u32 %s2, 4
      %s94 = int_to_ptr.hbm [resolvable:$true] %s93
      %96 = dma.vmem_to_hbm [thread:$0]  %s92, 128, %s94, [#allocation4]
    $region21: #{tpu_custom_call.1} parent=1 // pred_fallthru
      _
    // Predicated region
    $region22: #{tpu_custom_call.1} parent=1 // pred_check
      _
    $region23: #{tpu_custom_call.1} parent=1 // pred_check_branch
      %98 = sbr.rel (0) target = $region25
    $region24: #{tpu_custom_call.1} parent=1 // pred_region
      %100 = dma.done [#allocation4], 128
    $region25: #{tpu_custom_call.1} parent=1 // pred_fallthru
      _
    %101 = vsyncpa [#allocation3], 1
    %102 = vsyncpa [#allocation6], 1
    %103 = vsyncpa [#allocation4], 1

</llo_original>
